<compile_context>
chip_gen: v5e
topology: v5e:2x2
jax: 0.10.0
libtpu: 0.0.40
codegen_flags: <defaults>
</compile_context>

<pallas_src>
import functools

import jax
import jax.numpy as jnp
from jax import lax
from jax.experimental import pallas as pl
from jax.experimental.pallas import tpu as pltpu


def _round_up(v, m):
    return ((v + m - 1) // m) * m


def _pick_block_rows(c, itemsize, vmem_budget_bytes=12 * 1024 * 1024):
    # Budget: double-buffered input tile (2 * TN * C * itemsize) plus roughly two
    # f32 row-major temporaries the body materializes (exp(x-m) and the masked
    # select).  Conservative so it also fits v7x's 64 MiB physical / 32 MiB
    # default scoped VMEM.
    bytes_per_row = c * (2 * itemsize + 2 * 4)
    tn = vmem_budget_bytes // max(bytes_per_row, 1)
    tn = max(8, min(1024, (tn // 8) * 8))
    return tn


def _make_kernel(n_true, c, tn, smoothing):
    confidence = 1.0 - smoothing
    inv_c = 1.0 / c
    inv_n = 1.0 / n_true

    def kernel(x_ref, tgt_ref, out_ref, acc_ref):
        pid = pl.program_id(0)

        @pl.when(pid == 0)
        def _():
            acc_ref[...] = jnp.zeros_like(acc_ref)

        x = x_ref[...].astype(jnp.float32)                 # (TN, C)
        tgt = tgt_ref[...]                                 # (TN, 1) int32

        # One pass over the tile: row max, logsumexp, row sum, gathered x_t.
        m = jnp.max(x, axis=-1, keepdims=True)             # (TN, 1)
        lse = m + jnp.log(jnp.sum(jnp.exp(x - m), axis=-1, keepdims=True))  # (TN, 1)
        row_sum = jnp.sum(x, axis=-1, keepdims=True)       # (TN, 1)

        col_ids = lax.broadcasted_iota(jnp.int32, (tn, c), 1)
        x_t = jnp.sum(jnp.where(col_ids == tgt, x, 0.0), axis=-1, keepdims=True)  # (TN, 1)

        # nll = -logprobs[target] = lse - x_t ; smooth = -mean(logprobs) = lse - mean(x)
        nll = lse - x_t
        smooth = lse - row_sum * inv_c
        loss = confidence * nll + smoothing * smooth       # (TN, 1)

        # Mask rows that are padding (global row id >= true N).
        row_ids = pid * tn + lax.broadcasted_iota(jnp.int32, (tn, 1), 0)
        valid = (row_ids < n_true).astype(jnp.float32)

        acc_ref[...] += jnp.sum(loss * valid, keepdims=True)   # (1, 1)

        @pl.when(pid == pl.num_programs(0) - 1)
        def _():
            out_ref[...] = acc_ref[...] * jnp.float32(inv_n)

    return kernel


@functools.partial(jax.jit, static_argnames=("smoothing",))
def label_smoothing_cross_entropy(x, target, smoothing=0.1):
    n, c = x.shape
    itemsize = jnp.dtype(x.dtype).itemsize

    tn = min(_pick_block_rows(c, itemsize), _round_up(n, 8))
    n_pad = _round_up(n, tn)
    if n_pad != n:
        x = jnp.pad(x, ((0, n_pad - n), (0, 0)))
        target = jnp.pad(target, (0, n_pad - n))
    tgt2d = target.astype(jnp.int32).reshape(n_pad, 1)

    grid = (n_pad // tn,)
    kernel = _make_kernel(n, c, tn, smoothing)

    cost = pl.CostEstimate(
        flops=5 * n * c,
        transcendentals=n * c + n,
        bytes_accessed=n * c * itemsize + n * 4 + 4,
    )

    out = pl.pallas_call(
        kernel,
        out_shape=jax.ShapeDtypeStruct((1, 1), jnp.float32),
        grid_spec=pltpu.PrefetchScalarGridSpec(
            num_scalar_prefetch=0,
            grid=grid,
            in_specs=[
                pl.BlockSpec((tn, c), lambda i: (i, 0)),
                pl.BlockSpec((tn, 1), lambda i: (i, 0)),
            ],
            out_specs=pl.BlockSpec((1, 1), lambda i: (0, 0)),
            scratch_shapes=[pltpu.VMEM((1, 1), jnp.float32)],
        ),
        compiler_params=pltpu.CompilerParams(
            dimension_semantics=("arbitrary",),   # accumulator resident across axis
            vmem_limit_bytes=32 * 1024 * 1024,
        ),
        cost_estimate=cost,
    )(x, tgt2d)
    return out[0, 0]


def _reference(x, target, smoothing=0.1):
    confidence = 1.0 - smoothing
    logprobs = jax.nn.log_softmax(x.astype(jnp.float32), axis=-1)
    nll = -jnp.take_along_axis(logprobs, target[:, None].astype(jnp.int32), axis=-1)[:, 0]
    smooth = -jnp.mean(logprobs, axis=-1)
    return jnp.mean(confidence * nll + smoothing * smooth)


if __name__ == "__main__":
    key = jax.random.PRNGKey(0)

    # Primary small test: batch=8, classes=32 (same as the module's expected layout).
    kx, kt, key = jax.random.split(key, 3)
    N, C = 8, 32
    x = jax.random.normal(kx, (N, C), dtype=jnp.float32)
    target = jax.random.randint(kt, (N,), 0, C, dtype=jnp.int32)

    loss = jax.block_until_ready(label_smoothing_cross_entropy(x, target))
    ref = _reference(x, target)
    assert jnp.allclose(loss, ref, atol=1e-5, rtol=1e-5), (loss, ref)

    # Non-divisible batch (exercises padding + row masking path).
    kx2, kt2 = jax.random.split(key)
    N2, C2 = 13, 40
    x2 = jax.random.normal(kx2, (N2, C2), dtype=jnp.float32)
    target2 = jax.random.randint(kt2, (N2,), 0, C2, dtype=jnp.int32)

    loss2 = jax.block_until_ready(label_smoothing_cross_entropy(x2, target2))
    ref2 = _reference(x2, target2)
    assert jnp.allclose(loss2, ref2, atol=1e-5, rtol=1e-5), (loss2, ref2)

    print("KERNEL_OK")
</pallas_src>

<mosaic_0001>
module attributes {stable_mosaic.version = 11 : i64} {
  func.func @kernel(%arg0: i32, %arg1: memref<8x32xf32, #tpu.memory_space<vmem>>, %arg2: memref<8x1xi32, #tpu.memory_space<vmem>>, %arg3: memref<1x1xf32, #tpu.memory_space<vmem>>, %arg4: memref<1x1xf32, #tpu.memory_space<vmem>>) attributes {dimension_semantics = [#tpu.dimension_semantics<arbitrary>], iteration_bounds = array<i64: 1>, scalar_prefetch = 0 : i64, scratch_operands = 1 : i64, tpu.core_type = #tpu.core_type<tc>, window_params = [{transform_indices = @transform_0, window_bounds = array<i64: 8, 32>}, {transform_indices = @transform_1, window_bounds = array<i64: 8, 1>}, {pipeline_mode = #tpu.pipeline_mode<synchronous>, transform_indices = @transform_2, window_bounds = array<i64: 1, 1>}]} {
    %c0_i32 = arith.constant 0 : i32
    %0 = arith.cmpi eq, %arg0, %c0_i32 : i32
    %1 = arith.extui %0 : i1 to i32
    %c0_i32_0 = arith.constant 0 : i32
    %2 = arith.cmpi ne, %1, %c0_i32_0 : i32
    scf.if %2 {
      %cst_19 = arith.constant 0.000000e+00 : f32
      %52 = vector.broadcast %cst_19 : f32 to vector<1x1xf32>
      %c0_20 = arith.constant 0 : index
      %c0_21 = arith.constant 0 : index
      %53 = vector.load %arg4[%c0_20, %c0_21] : memref<1x1xf32, #tpu.memory_space<vmem>>, vector<1x1xf32>
      tpu.vector_store %arg4[%c0_20, %c0_21], %52 {strides = array<i32>} : memref<1x1xf32, #tpu.memory_space<vmem>>, vector<1x1xf32>,
    } else {
    }
    %c0 = arith.constant 0 : index
    %c0_1 = arith.constant 0 : index
    %3 = vector.load %arg1[%c0, %c0_1] : memref<8x32xf32, #tpu.memory_space<vmem>>, vector<8x32xf32>
    %c0_2 = arith.constant 0 : index
    %c0_3 = arith.constant 0 : index
    %4 = vector.load %arg2[%c0_2, %c0_3] : memref<8x1xi32, #tpu.memory_space<vmem>>, vector<8x1xi32>
    %cst = arith.constant dense<0xFF800000> : vector<8xf32>
    %5 = vector.multi_reduction <maximumf>, %3, %cst [1] : vector<8x32xf32> to vector<8xf32>
    %6 = vector.shape_cast %5 : vector<8xf32> to vector<8x1xf32>
    %7 = vector.broadcast %6 : vector<8x1xf32> to vector<8x32xf32>
    %8 = arith.subf %3, %7 : vector<8x32xf32>
    %9 = math.exp %8 : vector<8x32xf32>
    %cst_4 = arith.constant dense<0.000000e+00> : vector<8xf32>
    %10 = vector.multi_reduction <add>, %9, %cst_4 [1] : vector<8x32xf32> to vector<8xf32>
    %11 = vector.shape_cast %10 : vector<8xf32> to vector<8x1xf32>
    %12 = math.log %11 : vector<8x1xf32>
    %13 = arith.addf %6, %12 : vector<8x1xf32>
    %cst_5 = arith.constant dense<0.000000e+00> : vector<8xf32>
    %14 = vector.multi_reduction <add>, %3, %cst_5 [1] : vector<8x32xf32> to vector<8xf32>
    %15 = vector.shape_cast %14 : vector<8xf32> to vector<8x1xf32>
    %16 = tpu.iota {dimensions = array<i32: 1>} : vector<8x32xi32>
    %17 = vector.broadcast %4 : vector<8x1xi32> to vector<8x32xi32>
    %18 = arith.cmpi eq, %16, %17 : vector<8x32xi32>
    %cst_6 = arith.constant 0.000000e+00 : f32
    %19 = vector.broadcast %cst_6 : f32 to vector<8x32xf32>
    %20 = arith.select %18, %3, %19 : vector<8x32xi1>, vector<8x32xf32>
    %cst_7 = arith.constant dense<0.000000e+00> : vector<8xf32>
    %21 = vector.multi_reduction <add>, %20, %cst_7 [1] : vector<8x32xf32> to vector<8xf32>
    %22 = vector.shape_cast %21 : vector<8xf32> to vector<8x1xf32>
    %23 = arith.subf %13, %22 : vector<8x1xf32>
    %cst_8 = arith.constant 3.125000e-02 : f32
    %24 = vector.broadcast %cst_8 : f32 to vector<8x1xf32>
    %25 = arith.mulf %15, %24 : vector<8x1xf32>
    %26 = arith.subf %13, %25 : vector<8x1xf32>
    %cst_9 = arith.constant 0.899999976 : f32
    %27 = vector.broadcast %cst_9 : f32 to vector<8x1xf32>
    %28 = arith.mulf %27, %23 : vector<8x1xf32>
    %cst_10 = arith.constant 1.000000e-01 : f32
    %29 = vector.broadcast %cst_10 : f32 to vector<8x1xf32>
    %30 = arith.mulf %29, %26 : vector<8x1xf32>
    %31 = arith.addf %28, %30 : vector<8x1xf32>
    %c8_i32 = arith.constant 8 : i32
    %32 = arith.muli %arg0, %c8_i32 : i32
    %33 = tpu.iota {dimensions = array<i32: 0>} : vector<8x1xi32>
    %34 = vector.broadcast %32 : i32 to vector<8x1xi32>
    %35 = arith.addi %34, %33 : vector<8x1xi32>
    %c8_i32_11 = arith.constant 8 : i32
    %36 = vector.broadcast %c8_i32_11 : i32 to vector<8x1xi32>
    %37 = arith.cmpi slt, %35, %36 : vector<8x1xi32>
    %38 = arith.extui %37 : vector<8x1xi1> to vector<8x1xi32>
    %39 = arith.sitofp %38 : vector<8x1xi32> to vector<8x1xf32>
    %c0_12 = arith.constant 0 : index
    %c0_13 = arith.constant 0 : index
    %40 = vector.load %arg4[%c0_12, %c0_13] : memref<1x1xf32, #tpu.memory_space<vmem>>, vector<1x1xf32>
    %41 = arith.mulf %31, %39 : vector<8x1xf32>
    %42 = vector.shape_cast %41 : vector<8x1xf32> to vector<1x8x1xf32>
    %cst_14 = arith.constant dense<0.000000e+00> : vector<1xf32>
    %43 = vector.multi_reduction <add>, %42, %cst_14 [1, 2] : vector<1x8x1xf32> to vector<1xf32>
    %44 = vector.shape_cast %43 : vector<1xf32> to vector<1x1x1xf32>
    %45 = vector.extract %44[0, 0, 0] : f32 from vector<1x1x1xf32>
    %46 = vector.broadcast %45 : f32 to vector<1x1xf32>
    %47 = arith.addf %40, %46 : vector<1x1xf32>
    %c0_15 = arith.constant 0 : index
    %c0_16 = arith.constant 0 : index
    %48 = vector.load %arg4[%c0_15, %c0_16] : memref<1x1xf32, #tpu.memory_space<vmem>>, vector<1x1xf32>
    tpu.vector_store %arg4[%c0_15, %c0_16], %47 {strides = array<i32>} : memref<1x1xf32, #tpu.memory_space<vmem>>, vector<1x1xf32>,
    %c0_i32_17 = arith.constant 0 : i32
    %49 = arith.cmpi eq, %arg0, %c0_i32_17 : i32
    %50 = arith.extui %49 : i1 to i32
    %c0_i32_18 = arith.constant 0 : i32
    %51 = arith.cmpi ne, %50, %c0_i32_18 : i32
    scf.if %51 {
      %c0_19 = arith.constant 0 : index
      %c0_20 = arith.constant 0 : index
      %52 = vector.load %arg4[%c0_19, %c0_20] : memref<1x1xf32, #tpu.memory_space<vmem>>, vector<1x1xf32>
      %cst_21 = arith.constant 1.250000e-01 : f32
      %53 = vector.broadcast %cst_21 : f32 to vector<1x1xf32>
      %54 = arith.mulf %52, %53 : vector<1x1xf32>
      %c0_22 = arith.constant 0 : index
      %c0_23 = arith.constant 0 : index
      %55 = vector.load %arg3[%c0_22, %c0_23] : memref<1x1xf32, #tpu.memory_space<vmem>>, vector<1x1xf32>
      tpu.vector_store %arg3[%c0_22, %c0_23], %54 {strides = array<i32>} : memref<1x1xf32, #tpu.memory_space<vmem>>, vector<1x1xf32>,
    } else {
    }
    return
  }
  func.func @transform_0(%arg0: i32) -> (i32, i32) {
    %c0_i32 = arith.constant 0 : i32
    %c0_i32_0 = arith.constant 0 : i32
    return %arg0, %c0_i32 : i32, i32
  }
  func.func @transform_1(%arg0: i32) -> (i32, i32) {
    %c0_i32 = arith.constant 0 : i32
    %c0_i32_0 = arith.constant 0 : i32
    return %arg0, %c0_i32 : i32, i32
  }
  func.func @transform_2(%arg0: i32) -> (i32, i32) {
    %c0_i32 = arith.constant 0 : i32
    %c0_i32_0 = arith.constant 0 : i32
    %c0_i32_1 = arith.constant 0 : i32
    return %c0_i32, %c0_i32_0 : i32, i32
  }
}

</mosaic_0001>

<llo_original>
// kernel: label_smoothing_cross_entropy.1
$region0: #{label_smoothing_cross_entropy.1}
  #allocation0 [shape = 'u32[]', space=smem, size = 0x4, offset = 0x4, fixed_abs, tag = 'smem constant byte address 0x4 - core index']
  #allocation1 [shape = 'u32[72,128]{1,0:T(1,128)}', space=vmem, size = 0x9000, scoped, tag = 'internal scratch']
  #allocation2 [shape = 'f32[1,1]{1,0:T(1,128)}', space=vmem, size = 0x200, scoped, tag = 'scratch operand']
  %s0 = inlined_call_operand.vmem [shape: f32[8,32], index: 0, kind: input, shape index: {}]
  %s1 = inlined_call_operand.vmem [shape: s32[8,1], index: 1, kind: input, shape index: {}]
  %s2 = inlined_call_operand.hbm [shape: f32[1,1], index: 2, kind: output, shape index: {}]
  %s3 = sld [smem:[#allocation0]]
  $region26: #{label_smoothing_cross_entropy.1} parent=0
    _
  %s5 = ssub.s32 1, %s3
  %s6 = scalar_select 0, %s5, %s3
  $region1: #{label_smoothing_cross_entropy.1} parent=0
    #allocation3 [shape = 'u8[512]{0}', space=vmem, size = 0x400, scoped, tag = 'output window, operand 0, single buffered']
    #allocation4 [shape = 's32[1]{0}', space=sflag, size = 0x4, scoped, tag = 'scoped memory for label_smoothing_cross_entropy.1']
    %7 = vsyncpa [#allocation4], 0
    // Predicated region
    $region2: #{label_smoothing_cross_entropy.1} parent=1 // pred_check
      _
    $region3: #{label_smoothing_cross_entropy.1} parent=1 // pred_check_branch
      %9 = sbr.rel (0) target = $region5
    $region4: #{label_smoothing_cross_entropy.1} parent=1 // pred_region
      _
    $region5: #{label_smoothing_cross_entropy.1} parent=1 // pred_fallthru
      _
    // Predicated region
    $region6: #{label_smoothing_cross_entropy.1} parent=1 // pred_check
      _
    $region7: #{label_smoothing_cross_entropy.1} parent=1 // pred_check_branch
      %11 = sbr.rel (0) target = $region9
    $region8: #{label_smoothing_cross_entropy.1} parent=1 // pred_region
      _
    $region9: #{label_smoothing_cross_entropy.1} parent=1 // pred_fallthru
      _
    %p12 = scmp.eq.s32.totalorder 0, 0
    // Predicated region
    $region10: #{label_smoothing_cross_entropy.1} parent=1 // pred_check
      %p13 = pneg %p12
    $region11: #{label_smoothing_cross_entropy.1} parent=1 // pred_check_branch
      %15 = sbr.rel (%p13) target = $region13
    $region12: #{label_smoothing_cross_entropy.1} parent=1 // pred_region
      %vm16 = vcmask 0
      %17 = vst.msk [vmem:[#allocation2] sm:$0x1] %vm16, 0.0
    $region13: #{label_smoothing_cross_entropy.1} parent=1 // pred_fallthru
      _
    %v18 = vld [vmem:[%s0] sm:$0xff]
    %v19 = vld [vmem:[%s1] sm:$0xff]
    %vm20 = vcmask 261120
    %v21 = vsel %vm20, %v18, -inf
    %22 = vmax.xlane.f32.xlu0 %v21
    %v23 = vpop.xlane.xlu0 %22
    %v24 = vsub.f32 %v18, %v23
    %v25 = vmul.f32 %v24, 1.442695
    %v26 = vpow.pop %v25
    %v27 = vsel %vm20, %v26, 0.0
    %28 = vadd.xlane.f32.xlu0 %v27
    %v29 = vpop.xlane.xlu0 %28
    %v30 = vlog2.pop %v29
    %v31 = vmul.f32 %v30, 0.6931472
    %v32 = vadd.f32 %v23, %v31
    %v33 = vsel %vm20, %v18, 0.0
    %34 = vadd.xlane.f32.xlu0 %v33
    %v35 = vpop.xlane.xlu0 %34
    %v36 = vlaneseq
    %v37 = vand.u32 %v36, 127
    %38 = vset.pattern.permute.xlu0 0
    %39 = vperm.xlu0 %38, %v19
    %v40 = vpop.permute.xlu0 %39
    %vm41 = vcmp.eq.s32.totalorder %v37, %v40
    %v42 = vsel %vm41, %v18, 0.0
    %v43 = vsel %vm20, %v42, 0.0
    %44 = vadd.xlane.f32.xlu0 %v43
    %v45 = vpop.xlane.xlu0 %44
    %v46 = vsub.f32 %v32, %v45
    %v47 = vmul.f32 %v35, 0.03125
    %v48 = vsub.f32 %v32, %v47
    %v49 = vmul.f32 %v46, 0.9
    %v50 = vmul.f32 %v48, 0.1
    %v51 = vadd.f32 %v49, %v50
    %s52 = smul.u32 0, 8
    %v53 = vlaneseq
    %v54 = vshrl.u32 %v53, 7
    %v55 = vstv %s52
    %v56 = vadd.s32 %v55, %v54
    %vm57 = vcmp.lt.s32.totalorder %v56, 8
    %v58 = vsel %vm57, 1, 0
    %v59 = vcvt.s32.f32 %v58
    %v60 = vld [vmem:[#allocation2] sm:$0x1]
    %v61 = vmul.f32 %v51, %v59
    %vm62 = vcmask 7168
    %v63 = vsel %vm62, %v61, 0.0
    %64 = vadd.xlane.f32.xlu0 %v63
    %v65 = vpop.xlane.xlu0 %64
    %v66 = vrot.slane %v65, 4
    %v67 = vadd.f32 %v65, %v66
    %v68 = vrot.slane %v67, 2
    %v69 = vadd.f32 %v67, %v68
    %v70 = vrot.slane %v69, 1
    %v71 = vadd.f32 %v69, %v70
    %s72 = vtos %v71
    %v73 = vstv %s72
    %v74 = vadd.f32 %v60, %v73
    %vm75 = vcmask 0
    %76 = vst.msk [vmem:[#allocation2] sm:$0x1] %vm75, %v74
    // Predicated region
    $region14: #{label_smoothing_cross_entropy.1} parent=1 // pred_check
      %p77 = pneg %p12
    $region15: #{label_smoothing_cross_entropy.1} parent=1 // pred_check_branch
      %79 = sbr.rel (%p77) target = $region17
    $region16: #{label_smoothing_cross_entropy.1} parent=1 // pred_region
      %v80 = vld [vmem:[#allocation2] sm:$0x1]
      %v81 = vmul.f32 %v80, 0.125
      %82 = vst.msk [vmem:[#allocation3] sm:$0x1] %vm75, %v81
    $region17: #{label_smoothing_cross_entropy.1} parent=1 // pred_fallthru
      _
    // Predicated region
    $region18: #{label_smoothing_cross_entropy.1} parent=1 // pred_check
      _
    $region19: #{label_smoothing_cross_entropy.1} parent=1 // pred_check_branch
      %84 = sbr.rel (0) target = $region21
    $region20: #{label_smoothing_cross_entropy.1} parent=1 // pred_region
      %86 = vsyncadd [#allocation4], 0
      %s88 = sshll.u32 [#allocation3], 4
      %s89 = int_to_ptr.vmem [resolvable:$true] %s88
      %s90 = sshll.u32 %s2, 4
      %s91 = int_to_ptr.hbm [resolvable:$true] %s90
      %93 = dma.vmem_to_hbm [thread:$0]  %s89, 16, %s91, [#allocation4]
    $region21: #{label_smoothing_cross_entropy.1} parent=1 // pred_fallthru
      _
    // Predicated region
    $region22: #{label_smoothing_cross_entropy.1} parent=1 // pred_check
      _
    $region23: #{label_smoothing_cross_entropy.1} parent=1 // pred_check_branch
      %95 = sbr.rel (0) target = $region25
    $region24: #{label_smoothing_cross_entropy.1} parent=1 // pred_region
      %97 = dma.done [#allocation4], 16
    $region25: #{label_smoothing_cross_entropy.1} parent=1 // pred_fallthru
      _
    %98 = vsyncpa [#allocation4], 1

</llo_original>
